<compile_context>
chip_gen: v7x
topology: tpu7x:2x2x1
jax: 0.10.0
libtpu: 0.0.40
codegen_flags: <defaults>
</compile_context>

<pallas_src>
import functools

import numpy as np
import jax
import jax.numpy as jnp
from jax.experimental import pallas as pl
from jax.experimental.pallas import tpu as pltpu

CP = 8  # channel count padded to one full f32 sublane group


# ----------------------------------------------------------------------------
# Diffusion schedule buffers (sigmoid beta schedule, objective='pred_v')
# ----------------------------------------------------------------------------
def make_buffers(timesteps=1000, start=-3.0, end=3.0, tau=1.0):
    def sigmoid(z):
        return 1.0 / (1.0 + np.exp(-z))

    steps = timesteps + 1
    t = np.linspace(0, timesteps, steps, dtype=np.float64) / timesteps
    v_start = sigmoid(start / tau)
    v_end = sigmoid(end / tau)
    alphas_cumprod = (-sigmoid((t * (end - start) + start) / tau) + v_end) / (v_end - v_start)
    alphas_cumprod = alphas_cumprod / alphas_cumprod[0]
    betas = np.clip(1.0 - alphas_cumprod[1:] / alphas_cumprod[:-1], 0.0, 0.999)

    alphas = 1.0 - betas
    alphas_cumprod = np.cumprod(alphas)
    sqrt_alphas_cumprod = np.sqrt(alphas_cumprod)
    sqrt_one_minus_alphas_cumprod = np.sqrt(1.0 - alphas_cumprod)
    snr = alphas_cumprod / (1.0 - alphas_cumprod)
    loss_weight = snr / (snr + 1.0)  # objective == 'pred_v', min_snr disabled

    return (jnp.asarray(sqrt_alphas_cumprod, jnp.float32),
            jnp.asarray(sqrt_one_minus_alphas_cumprod, jnp.float32),
            jnp.asarray(loss_weight, jnp.float32))


# ----------------------------------------------------------------------------
# Deterministic surrogate-model parameters
# ----------------------------------------------------------------------------
def make_params(C, n_latents=16, d_latents=32, seed=1234):
    k1, k2, k3, k4, k5, k6 = jax.random.split(jax.random.PRNGKey(seed), 6)
    Wc = jnp.eye(C, dtype=jnp.float32) + 0.1 * jax.random.normal(k1, (C, C), jnp.float32)
    bias = 0.1 * jax.random.normal(k2, (C,), jnp.float32)
    gamma = 0.1 * jax.random.normal(k3, (C,), jnp.float32)
    tvec = 0.1 * jax.random.normal(k4, (C,), jnp.float32)
    # Surrogate latent tables: latents(x) = L_base + mean(x) * L_scale; only the
    # mean readout enters the second model call, so pass the two means as scalars.
    L_base = jax.random.normal(k5, (n_latents, d_latents), jnp.float32)
    L_scale = jax.random.normal(k6, (n_latents, d_latents), jnp.float32)
    lconst = jnp.stack([jnp.mean(L_base), jnp.mean(L_scale)]).astype(jnp.float32)
    return Wc, bias, gamma, tvec, lconst


def _pick_hw_tile(hw, max_tile=2048):
    """Lane-dense HW tile: whole row if small, else a multiple-of-128 divisor."""
    if hw <= max_tile:
        return hw
    for t in (max_tile, 1024, 512, 256, 128):
        if hw % t == 0:
            return t
    return hw  # fall back: full-extent block is always legal


# ----------------------------------------------------------------------------
# Pallas kernel: one (batch b, HW tile k) grid step.
#   normalize -> q_sample -> MXU channel mix -> elementwise accumulation;
#   single reduction + latent-conditioned weighted MSE at the last HW tile.
# ----------------------------------------------------------------------------
def diffusion_loss_kernel(sa_ref, s1ma_ref, lw_ref, mask_ref, temb_ref, lconst_ref,
                          w_ref, bias_ref, tvec_ref, gamma_ref,
                          img_ref, noise_ref,
                          loss_ref,
                          acc_x_ref, acc_e_ref, acc_ee_ref,
                          *, n_chan, hw_total):
    b = pl.program_id(0)
    k = pl.program_id(1)

    @pl.when(k == 0)
    def _init():
        acc_x_ref[...] = jnp.zeros_like(acc_x_ref)
        acc_e_ref[...] = jnp.zeros_like(acc_e_ref)
        acc_ee_ref[...] = jnp.zeros_like(acc_ee_ref)

    sa = sa_ref[b]        # sqrt(alpha_bar_t)         (SMEM scalar)
    s1ma = s1ma_ref[b]    # sqrt(1 - alpha_bar_t)
    temb = temb_ref[b]    # time-embedding scalar

    # auto_normalize fused in-kernel; padded channel rows were padded with 0.5
    # in the wrapper so 2*x-1 keeps them at exactly 0.
    x0 = img_ref[0] * 2.0 - 1.0            # (CP, T)
    nz = noise_ref[0]                      # (CP, T)

    # q_sample and pred_v target -- scalar-from-SMEM splats, no jnp.full.
    x = sa * x0 + s1ma * nz
    v = sa * nz - s1ma * x0

    # Surrogate model call #2 channel mix on the MXU (channels padded 4->8).
    mix = jnp.dot(w_ref[...], x, preferred_element_type=jnp.float32)
    # Latent-independent residual: e = W@x + bias + temb*tvec - v.
    e = mix + bias_ref[...] + temb * tvec_ref[...] - v

    # Elementwise accumulators; reduced once at the last HW tile of this batch.
    acc_x_ref[...] += x
    acc_e_ref[...] += e
    acc_ee_ref[...] += e * e

    @pl.when(k == pl.num_programs(1) - 1)
    def _finalize():
        gamma = gamma_ref[...]                      # (CP, 1)
        s_x = jnp.sum(acc_x_ref[...])               # sum(x_t)           per batch
        s_eg = jnp.sum(acc_e_ref[...] * gamma)      # sum(e * gamma_c)   per batch
        s_ee = jnp.sum(acc_ee_ref[...])             # sum(e^2)           per batch
        s_g2 = jnp.sum(gamma * gamma)               # sum_c gamma_c^2

        inv_cnt = 1.0 / float(n_chan * hw_total)
        # Surrogate model call #1: masked self-conditioning latent readout.
        mean_x = s_x * inv_cnt
        lat = mask_ref[b] * (lconst_ref[0] + mean_x * lconst_ref[1])

        # sum (y - v)^2 = sum e^2 + 2*lat*sum(e*gamma) + lat^2 * HW * sum(gamma^2)
        total_sq = s_ee + 2.0 * lat * s_eg + lat * lat * float(hw_total) * s_g2
        loss_b = lw_ref[b] * total_sq * inv_cnt     # loss_weight[t_b] * mean_chw
        loss_ref[...] = jnp.full((1, 1, 1), loss_b, dtype=jnp.float32)


# ----------------------------------------------------------------------------
# Shared training-time randomness (matches p_losses / forward draws)
# ----------------------------------------------------------------------------
def draw_training_randomness(key, img_shape, num_timesteps, train_prob_self_cond=0.9):
    B = img_shape[0]
    k_t, k_noise, k_mask = jax.random.split(key, 3)
    t = jax.random.randint(k_t, (B,), 0, num_timesteps, dtype=jnp.int32)
    noise = jax.random.normal(k_noise, img_shape, dtype=jnp.float32)
    mask = (jax.random.uniform(k_mask, (B,)) < train_prob_self_cond).astype(jnp.float32)
    return t, noise, mask


# ----------------------------------------------------------------------------
# Wrapper: GaussianDiffusion.forward
# ----------------------------------------------------------------------------
def gaussian_diffusion_forward(img, key, params, buffers, num_timesteps):
    B, C, H, W = img.shape
    HW = H * W
    assert C <= CP
    sqrt_ac, sqrt_1mac, loss_weight = buffers
    Wc, bias, gamma, tvec, lconst = params

    t, noise, mask = draw_training_randomness(key, img.shape, num_timesteps)

    sa = sqrt_ac[t]
    s1ma = sqrt_1mac[t]
    lw = loss_weight[t]
    temb = jnp.sin(t.astype(jnp.float32))

    # Pad channels 4 -> 8 so every slab is (8,128)-sublane aligned. img pads
    # with 0.5 so the in-kernel auto_normalize (2x-1) keeps padded rows at 0;
    # noise / model params pad with 0, so padded rows contribute 0 to the loss.
    img_flat = img.astype(jnp.float32).reshape(B, C, HW)
    noise_flat = noise.reshape(B, C, HW)
    chan_pad = ((0, 0), (0, CP - C), (0, 0))
    img_p = jnp.pad(img_flat, chan_pad, constant_values=0.5)
    noise_p = jnp.pad(noise_flat, chan_pad, constant_values=0.0)

    w_p = jnp.zeros((CP, CP), jnp.float32).at[:C, :C].set(Wc)
    bias_col = jnp.zeros((CP, 1), jnp.float32).at[:C, 0].set(bias)
    tvec_col = jnp.zeros((CP, 1), jnp.float32).at[:C, 0].set(tvec)
    gamma_col = jnp.zeros((CP, 1), jnp.float32).at[:C, 0].set(gamma)

    T = _pick_hw_tile(HW)          # lane-dense HW tile (full HW at toy sizes)
    n_hw = HW // T

    smem = pl.BlockSpec(memory_space=pltpu.MemorySpace.SMEM)
    kernel = functools.partial(diffusion_loss_kernel, n_chan=C, hw_total=HW)

    out = pl.pallas_call(
        kernel,
        out_shape=jax.ShapeDtypeStruct((B, 1, 1), jnp.float32),
        grid=(B, n_hw),
        in_specs=[
            smem,   # sa      (B,)
            smem,   # s1ma    (B,)
            smem,   # lw      (B,)
            smem,   # mask    (B,)
            smem,   # temb    (B,)
            smem,   # lconst  (2,)
            pl.BlockSpec((CP, CP), lambda b, k: (0, 0)),        # W padded (8,8)
            pl.BlockSpec((CP, 1), lambda b, k: (0, 0)),         # bias column
            pl.BlockSpec((CP, 1), lambda b, k: (0, 0)),         # tvec column
            pl.BlockSpec((CP, 1), lambda b, k: (0, 0)),         # gamma column
            pl.BlockSpec((1, CP, T), lambda b, k: (b, 0, k)),   # img  (padded)
            pl.BlockSpec((1, CP, T), lambda b, k: (b, 0, k)),   # noise (padded)
        ],
        out_specs=pl.BlockSpec((1, 1, 1), lambda b, k: (b, 0, 0)),   # per-batch loss
        scratch_shapes=[
            pltpu.VMEM((CP, T), jnp.float32),   # acc_x
            pltpu.VMEM((CP, T), jnp.float32),   # acc_e
            pltpu.VMEM((CP, T), jnp.float32),   # acc_ee
        ],
        compiler_params=pltpu.CompilerParams(
            # batch axis parallel (v7x megacore), HW reduction axis arbitrary
            dimension_semantics=("parallel", "arbitrary"),
            # explicit, comfortably under v7x's 64 MiB physical VMEM
            vmem_limit_bytes=48 * 1024 * 1024,
        ),
    )(sa, s1ma, lw, mask, temb, lconst,
      w_p, bias_col, tvec_col, gamma_col, img_p, noise_p)

    return jnp.mean(out[:, 0, 0])


# ----------------------------------------------------------------------------
# Pure-JAX reference (same math, same randomness) for a sanity check
# ----------------------------------------------------------------------------
def reference_forward(img, key, params, buffers, num_timesteps):
    B, C, H, W = img.shape
    HW = H * W
    sqrt_ac, sqrt_1mac, loss_weight = buffers
    Wc, bias, gamma, tvec, lconst = params

    t, noise, mask = draw_training_randomness(key, img.shape, num_timesteps)
    x_start = img.astype(jnp.float32) * 2.0 - 1.0

    sa = sqrt_ac[t][:, None, None]
    s1ma = sqrt_1mac[t][:, None, None]
    lw = loss_weight[t]
    temb = jnp.sin(t.astype(jnp.float32))

    x0 = x_start.reshape(B, C, HW)
    nz = noise.reshape(B, C, HW)

    x = sa * x0 + s1ma * nz
    mean_x = jnp.mean(x, axis=(1, 2))
    lat = mask * (lconst[0] + mean_x * lconst[1])

    y = jnp.einsum('ij,bjp->bip', Wc, x)
    y = (y + bias[None, :, None] + temb[:, None, None] * tvec[None, :, None]
         + lat[:, None, None] * gamma[None, :, None])

    v = sa * nz - s1ma * x0
    per_b = lw * jnp.mean((y - v) ** 2, axis=(1, 2))
    return jnp.mean(per_b)


if __name__ == "__main__":
    B, C, H = 2, 4, 16
    NUM_TIMESTEPS = 1000

    key = jax.random.PRNGKey(0)
    k_img, k_fwd = jax.random.split(key)

    img = jax.random.uniform(k_img, (B, C, H, H), dtype=jnp.float32)  # NCHW, in [0, 1]

    buffers = make_buffers(NUM_TIMESTEPS)
    params = make_params(C)

    loss = gaussian_diffusion_forward(img, k_fwd, params, buffers, NUM_TIMESTEPS)
    jax.block_until_ready(loss)

    ref = reference_forward(img, k_fwd, params, buffers, NUM_TIMESTEPS)
    assert jnp.isfinite(loss), loss
    assert jnp.allclose(loss, ref, rtol=2e-3, atol=2e-4), (float(loss), float(ref))

    print("KERNEL_OK")
</pallas_src>

<mosaic_0001>
module attributes {stable_mosaic.version = 11 : i64} {
  func.func @diffusion_loss_kernel(%arg0: i32, %arg1: i32, %arg2: memref<2xf32, #tpu.memory_space<smem>>, %arg3: memref<2xf32, #tpu.memory_space<smem>>, %arg4: memref<2xf32, #tpu.memory_space<smem>>, %arg5: memref<2xf32, #tpu.memory_space<smem>>, %arg6: memref<2xf32, #tpu.memory_space<smem>>, %arg7: memref<2xf32, #tpu.memory_space<smem>>, %arg8: memref<8x8xf32, #tpu.memory_space<vmem>>, %arg9: memref<8x1xf32, #tpu.memory_space<vmem>>, %arg10: memref<8x1xf32, #tpu.memory_space<vmem>>, %arg11: memref<8x1xf32, #tpu.memory_space<vmem>>, %arg12: memref<1x8x256xf32, #tpu.memory_space<vmem>>, %arg13: memref<1x8x256xf32, #tpu.memory_space<vmem>>, %arg14: memref<1x1x1xf32, #tpu.memory_space<vmem>>, %arg15: memref<8x256xf32, #tpu.memory_space<vmem>>, %arg16: memref<8x256xf32, #tpu.memory_space<vmem>>, %arg17: memref<8x256xf32, #tpu.memory_space<vmem>>) attributes {dimension_semantics = [#tpu.dimension_semantics<parallel>, #tpu.dimension_semantics<arbitrary>], iteration_bounds = array<i64: 2, 1>, scalar_prefetch = 0 : i64, scratch_operands = 3 : i64, tpu.core_type = #tpu.core_type<tc>, window_params = [{transform_indices = @transform_0, window_bounds = array<i64: 2>}, {transform_indices = @transform_1, window_bounds = array<i64: 2>}, {transform_indices = @transform_2, window_bounds = array<i64: 2>}, {transform_indices = @transform_3, window_bounds = array<i64: 2>}, {transform_indices = @transform_4, window_bounds = array<i64: 2>}, {transform_indices = @transform_5, window_bounds = array<i64: 2>}, {pipeline_mode = #tpu.pipeline_mode<synchronous>, transform_indices = @transform_6, window_bounds = array<i64: 8, 8>}, {pipeline_mode = #tpu.pipeline_mode<synchronous>, transform_indices = @transform_7, window_bounds = array<i64: 8, 1>}, {pipeline_mode = #tpu.pipeline_mode<synchronous>, transform_indices = @transform_8, window_bounds = array<i64: 8, 1>}, {pipeline_mode = #tpu.pipeline_mode<synchronous>, transform_indices = @transform_9, window_bounds = array<i64: 8, 1>}, {transform_indices = @transform_10, window_bounds = array<i64: 1, 8, 256>}, {transform_indices = @transform_11, window_bounds = array<i64: 1, 8, 256>}, {transform_indices = @transform_12, window_bounds = array<i64: 1, 1, 1>}]} {
    %c0_i32 = arith.constant 0 : i32
    %0 = arith.cmpi eq, %arg1, %c0_i32 : i32
    %1 = arith.extui %0 : i1 to i32
    %c0_i32_0 = arith.constant 0 : i32
    %2 = arith.cmpi ne, %1, %c0_i32_0 : i32
    scf.if %2 {
      %cst_28 = arith.constant 0.000000e+00 : f32
      %51 = vector.broadcast %cst_28 : f32 to vector<8x256xf32>
      %c0_29 = arith.constant 0 : index
      %c0_30 = arith.constant 0 : index
      %52 = vector.load %arg15[%c0_29, %c0_30] : memref<8x256xf32, #tpu.memory_space<vmem>>, vector<8x256xf32>
      tpu.vector_store %arg15[%c0_29, %c0_30], %51 {strides = array<i32>} : memref<8x256xf32, #tpu.memory_space<vmem>>, vector<8x256xf32>,
      %cst_31 = arith.constant 0.000000e+00 : f32
      %53 = vector.broadcast %cst_31 : f32 to vector<8x256xf32>
      %c0_32 = arith.constant 0 : index
      %c0_33 = arith.constant 0 : index
      %54 = vector.load %arg16[%c0_32, %c0_33] : memref<8x256xf32, #tpu.memory_space<vmem>>, vector<8x256xf32>
      tpu.vector_store %arg16[%c0_32, %c0_33], %53 {strides = array<i32>} : memref<8x256xf32, #tpu.memory_space<vmem>>, vector<8x256xf32>,
      %cst_34 = arith.constant 0.000000e+00 : f32
      %55 = vector.broadcast %cst_34 : f32 to vector<8x256xf32>
      %c0_35 = arith.constant 0 : index
      %c0_36 = arith.constant 0 : index
      %56 = vector.load %arg17[%c0_35, %c0_36] : memref<8x256xf32, #tpu.memory_space<vmem>>, vector<8x256xf32>
      tpu.vector_store %arg17[%c0_35, %c0_36], %55 {strides = array<i32>} : memref<8x256xf32, #tpu.memory_space<vmem>>, vector<8x256xf32>,
    } else {
    }
    %3 = arith.index_cast %arg0 : i32 to index
    %4 = memref.load %arg2[%3] : memref<2xf32, #tpu.memory_space<smem>>
    %5 = arith.index_cast %arg0 : i32 to index
    %6 = memref.load %arg3[%5] : memref<2xf32, #tpu.memory_space<smem>>
    %7 = arith.index_cast %arg0 : i32 to index
    %8 = memref.load %arg6[%7] : memref<2xf32, #tpu.memory_space<smem>>
    %c0 = arith.constant 0 : index
    %c0_1 = arith.constant 0 : index
    %c0_2 = arith.constant 0 : index
    %9 = vector.load %arg12[%c0, %c0_1, %c0_2] : memref<1x8x256xf32, #tpu.memory_space<vmem>>, vector<1x8x256xf32>
    %10 = vector.shape_cast %9 : vector<1x8x256xf32> to vector<8x256xf32>
    %cst = arith.constant 2.000000e+00 : f32
    %11 = vector.broadcast %cst : f32 to vector<8x256xf32>
    %12 = arith.mulf %10, %11 : vector<8x256xf32>
    %cst_3 = arith.constant 1.000000e+00 : f32
    %13 = vector.broadcast %cst_3 : f32 to vector<8x256xf32>
    %14 = arith.subf %12, %13 : vector<8x256xf32>
    %c0_4 = arith.constant 0 : index
    %c0_5 = arith.constant 0 : index
    %c0_6 = arith.constant 0 : index
    %15 = vector.load %arg13[%c0_4, %c0_5, %c0_6] : memref<1x8x256xf32, #tpu.memory_space<vmem>>, vector<1x8x256xf32>
    %16 = vector.shape_cast %15 : vector<1x8x256xf32> to vector<8x256xf32>
    %17 = vector.broadcast %4 : f32 to vector<8x256xf32>
    %18 = arith.mulf %17, %14 : vector<8x256xf32>
    %19 = vector.broadcast %6 : f32 to vector<8x256xf32>
    %20 = arith.mulf %19, %16 : vector<8x256xf32>
    %21 = arith.addf %18, %20 : vector<8x256xf32>
    %22 = vector.broadcast %4 : f32 to vector<8x256xf32>
    %23 = arith.mulf %22, %16 : vector<8x256xf32>
    %24 = vector.broadcast %6 : f32 to vector<8x256xf32>
    %25 = arith.mulf %24, %14 : vector<8x256xf32>
    %26 = arith.subf %23, %25 : vector<8x256xf32>
    %c0_7 = arith.constant 0 : index
    %c0_8 = arith.constant 0 : index
    %27 = vector.load %arg8[%c0_7, %c0_8] : memref<8x8xf32, #tpu.memory_space<vmem>>, vector<8x8xf32>
    %cst_9 = arith.constant dense<0.000000e+00> : vector<8x256xf32>
    %28 = tpu.matmul %27, %21, %cst_9 {dimension_numbers = #tpu.dot_dimension_numbers<[1], [0], [0], [1], [0, 0, 1, 1], [], []>} : vector<8x8xf32>, vector<8x256xf32>, vector<8x256xf32> -> vector<8x256xf32>
    %c0_10 = arith.constant 0 : index
    %c0_11 = arith.constant 0 : index
    %29 = vector.load %arg9[%c0_10, %c0_11] : memref<8x1xf32, #tpu.memory_space<vmem>>, vector<8x1xf32>
    %30 = vector.broadcast %29 : vector<8x1xf32> to vector<8x256xf32>
    %31 = arith.addf %28, %30 : vector<8x256xf32>
    %c0_12 = arith.constant 0 : index
    %c0_13 = arith.constant 0 : index
    %32 = vector.load %arg10[%c0_12, %c0_13] : memref<8x1xf32, #tpu.memory_space<vmem>>, vector<8x1xf32>
    %33 = vector.broadcast %8 : f32 to vector<8x1xf32>
    %34 = arith.mulf %33, %32 : vector<8x1xf32>
    %35 = vector.broadcast %34 : vector<8x1xf32> to vector<8x256xf32>
    %36 = arith.addf %31, %35 : vector<8x256xf32>
    %37 = arith.subf %36, %26 : vector<8x256xf32>
    %c0_14 = arith.constant 0 : index
    %c0_15 = arith.constant 0 : index
    %38 = vector.load %arg15[%c0_14, %c0_15] : memref<8x256xf32, #tpu.memory_space<vmem>>, vector<8x256xf32>
    %39 = arith.addf %38, %21 : vector<8x256xf32>
    %c0_16 = arith.constant 0 : index
    %c0_17 = arith.constant 0 : index
    %40 = vector.load %arg15[%c0_16, %c0_17] : memref<8x256xf32, #tpu.memory_space<vmem>>, vector<8x256xf32>
    tpu.vector_store %arg15[%c0_16, %c0_17], %39 {strides = array<i32>} : memref<8x256xf32, #tpu.memory_space<vmem>>, vector<8x256xf32>,
    %c0_18 = arith.constant 0 : index
    %c0_19 = arith.constant 0 : index
    %41 = vector.load %arg16[%c0_18, %c0_19] : memref<8x256xf32, #tpu.memory_space<vmem>>, vector<8x256xf32>
    %42 = arith.addf %41, %37 : vector<8x256xf32>
    %c0_20 = arith.constant 0 : index
    %c0_21 = arith.constant 0 : index
    %43 = vector.load %arg16[%c0_20, %c0_21] : memref<8x256xf32, #tpu.memory_space<vmem>>, vector<8x256xf32>
    tpu.vector_store %arg16[%c0_20, %c0_21], %42 {strides = array<i32>} : memref<8x256xf32, #tpu.memory_space<vmem>>, vector<8x256xf32>,
    %c0_22 = arith.constant 0 : index
    %c0_23 = arith.constant 0 : index
    %44 = vector.load %arg17[%c0_22, %c0_23] : memref<8x256xf32, #tpu.memory_space<vmem>>, vector<8x256xf32>
    %45 = arith.mulf %37, %37 : vector<8x256xf32>
    %46 = arith.addf %44, %45 : vector<8x256xf32>
    %c0_24 = arith.constant 0 : index
    %c0_25 = arith.constant 0 : index
    %47 = vector.load %arg17[%c0_24, %c0_25] : memref<8x256xf32, #tpu.memory_space<vmem>>, vector<8x256xf32>
    tpu.vector_store %arg17[%c0_24, %c0_25], %46 {strides = array<i32>} : memref<8x256xf32, #tpu.memory_space<vmem>>, vector<8x256xf32>,
    %c0_i32_26 = arith.constant 0 : i32
    %48 = arith.cmpi eq, %arg1, %c0_i32_26 : i32
    %49 = arith.extui %48 : i1 to i32
    %c0_i32_27 = arith.constant 0 : i32
    %50 = arith.cmpi ne, %49, %c0_i32_27 : i32
    scf.if %50 {
      %c0_28 = arith.constant 0 : index
      %c0_29 = arith.constant 0 : index
      %51 = vector.load %arg11[%c0_28, %c0_29] : memref<8x1xf32, #tpu.memory_space<vmem>>, vector<8x1xf32>
      %c0_30 = arith.constant 0 : index
      %c0_31 = arith.constant 0 : index
      %52 = vector.load %arg15[%c0_30, %c0_31] : memref<8x256xf32, #tpu.memory_space<vmem>>, vector<8x256xf32>
      %53 = vector.shape_cast %52 : vector<8x256xf32> to vector<1x8x256xf32>
      %cst_32 = arith.constant dense<0.000000e+00> : vector<1xf32>
      %54 = vector.multi_reduction <add>, %53, %cst_32 [1, 2] : vector<1x8x256xf32> to vector<1xf32>
      %55 = vector.shape_cast %54 : vector<1xf32> to vector<1x1x1xf32>
      %56 = vector.extract %55[0, 0, 0] : f32 from vector<1x1x1xf32>
      %c0_33 = arith.constant 0 : index
      %c0_34 = arith.constant 0 : index
      %57 = vector.load %arg16[%c0_33, %c0_34] : memref<8x256xf32, #tpu.memory_space<vmem>>, vector<8x256xf32>
      %58 = vector.broadcast %51 : vector<8x1xf32> to vector<8x256xf32>
      %59 = arith.mulf %57, %58 : vector<8x256xf32>
      %60 = vector.shape_cast %59 : vector<8x256xf32> to vector<1x8x256xf32>
      %cst_35 = arith.constant dense<0.000000e+00> : vector<1xf32>
      %61 = vector.multi_reduction <add>, %60, %cst_35 [1, 2] : vector<1x8x256xf32> to vector<1xf32>
      %62 = vector.shape_cast %61 : vector<1xf32> to vector<1x1x1xf32>
      %63 = vector.extract %62[0, 0, 0] : f32 from vector<1x1x1xf32>
      %c0_36 = arith.constant 0 : index
      %c0_37 = arith.constant 0 : index
      %64 = vector.load %arg17[%c0_36, %c0_37] : memref<8x256xf32, #tpu.memory_space<vmem>>, vector<8x256xf32>
      %65 = vector.shape_cast %64 : vector<8x256xf32> to vector<1x8x256xf32>
      %cst_38 = arith.constant dense<0.000000e+00> : vector<1xf32>
      %66 = vector.multi_reduction <add>, %65, %cst_38 [1, 2] : vector<1x8x256xf32> to vector<1xf32>
      %67 = vector.shape_cast %66 : vector<1xf32> to vector<1x1x1xf32>
      %68 = vector.extract %67[0, 0, 0] : f32 from vector<1x1x1xf32>
      %69 = arith.mulf %51, %51 : vector<8x1xf32>
      %70 = vector.shape_cast %69 : vector<8x1xf32> to vector<1x8x1xf32>
      %cst_39 = arith.constant dense<0.000000e+00> : vector<1xf32>
      %71 = vector.multi_reduction <add>, %70, %cst_39 [1, 2] : vector<1x8x1xf32> to vector<1xf32>
      %72 = vector.shape_cast %71 : vector<1xf32> to vector<1x1x1xf32>
      %73 = vector.extract %72[0, 0, 0] : f32 from vector<1x1x1xf32>
      %cst_40 = arith.constant 9.765625E-4 : f32
      %74 = arith.mulf %56, %cst_40 : f32
      %75 = arith.index_cast %arg0 : i32 to index
      %76 = memref.load %arg5[%75] : memref<2xf32, #tpu.memory_space<smem>>
      %c0_41 = arith.constant 0 : index
      %77 = memref.load %arg7[%c0_41] : memref<2xf32, #tpu.memory_space<smem>>
      %c1 = arith.constant 1 : index
      %78 = memref.load %arg7[%c1] : memref<2xf32, #tpu.memory_space<smem>>
      %79 = arith.mulf %74, %78 : f32
      %80 = arith.addf %77, %79 : f32
      %81 = arith.mulf %76, %80 : f32
      %cst_42 = arith.constant 2.000000e+00 : f32
      %82 = arith.mulf %cst_42, %81 : f32
      %83 = arith.mulf %82, %63 : f32
      %84 = arith.addf %68, %83 : f32
      %85 = arith.mulf %81, %81 : f32
      %cst_43 = arith.constant 2.560000e+02 : f32
      %86 = arith.mulf %85, %cst_43 : f32
      %87 = arith.mulf %86, %73 : f32
      %88 = arith.addf %84, %87 : f32
      %89 = arith.index_cast %arg0 : i32 to index
      %90 = memref.load %arg4[%89] : memref<2xf32, #tpu.memory_space<smem>>
      %91 = arith.mulf %90, %88 : f32
      %cst_44 = arith.constant 9.765625E-4 : f32
      %92 = arith.mulf %91, %cst_44 : f32
      %93 = vector.broadcast %92 : f32 to vector<1x1x1xf32>
      %c0_45 = arith.constant 0 : index
      %c0_46 = arith.constant 0 : index
      %c0_47 = arith.constant 0 : index
      %94 = vector.load %arg14[%c0_45, %c0_46, %c0_47] : memref<1x1x1xf32, #tpu.memory_space<vmem>>, vector<1x1x1xf32>
      tpu.vector_store %arg14[%c0_45, %c0_46, %c0_47], %93 {strides = array<i32>} : memref<1x1x1xf32, #tpu.memory_space<vmem>>, vector<1x1x1xf32>,
    } else {
    }
    return
  }
  func.func @transform_0(%arg0: i32, %arg1: i32) -> i32 {
    %c0_i32 = arith.constant 0 : i32
    %c0_i32_0 = arith.constant 0 : i32
    return %c0_i32 : i32
  }
  func.func @transform_1(%arg0: i32, %arg1: i32) -> i32 {
    %c0_i32 = arith.constant 0 : i32
    %c0_i32_0 = arith.constant 0 : i32
    return %c0_i32 : i32
  }
  func.func @transform_2(%arg0: i32, %arg1: i32) -> i32 {
    %c0_i32 = arith.constant 0 : i32
    %c0_i32_0 = arith.constant 0 : i32
    return %c0_i32 : i32
  }
  func.func @transform_3(%arg0: i32, %arg1: i32) -> i32 {
    %c0_i32 = arith.constant 0 : i32
    %c0_i32_0 = arith.constant 0 : i32
    return %c0_i32 : i32
  }
  func.func @transform_4(%arg0: i32, %arg1: i32) -> i32 {
    %c0_i32 = arith.constant 0 : i32
    %c0_i32_0 = arith.constant 0 : i32
    return %c0_i32 : i32
  }
  func.func @transform_5(%arg0: i32, %arg1: i32) -> i32 {
    %c0_i32 = arith.constant 0 : i32
    %c0_i32_0 = arith.constant 0 : i32
    return %c0_i32 : i32
  }
  func.func @transform_6(%arg0: i32, %arg1: i32) -> (i32, i32) {
    %c0_i32 = arith.constant 0 : i32
    %c0_i32_0 = arith.constant 0 : i32
    %c0_i32_1 = arith.constant 0 : i32
    return %c0_i32, %c0_i32_0 : i32, i32
  }
  func.func @transform_7(%arg0: i32, %arg1: i32) -> (i32, i32) {
    %c0_i32 = arith.constant 0 : i32
    %c0_i32_0 = arith.constant 0 : i32
    %c0_i32_1 = arith.constant 0 : i32
    return %c0_i32, %c0_i32_0 : i32, i32
  }
  func.func @transform_8(%arg0: i32, %arg1: i32) -> (i32, i32) {
    %c0_i32 = arith.constant 0 : i32
    %c0_i32_0 = arith.constant 0 : i32
    %c0_i32_1 = arith.constant 0 : i32
    return %c0_i32, %c0_i32_0 : i32, i32
  }
  func.func @transform_9(%arg0: i32, %arg1: i32) -> (i32, i32) {
    %c0_i32 = arith.constant 0 : i32
    %c0_i32_0 = arith.constant 0 : i32
    %c0_i32_1 = arith.constant 0 : i32
    return %c0_i32, %c0_i32_0 : i32, i32
  }
  func.func @transform_10(%arg0: i32, %arg1: i32) -> (i32, i32, i32) {
    %c0_i32 = arith.constant 0 : i32
    %c0_i32_0 = arith.constant 0 : i32
    return %arg0, %c0_i32, %arg1 : i32, i32, i32
  }
  func.func @transform_11(%arg0: i32, %arg1: i32) -> (i32, i32, i32) {
    %c0_i32 = arith.constant 0 : i32
    %c0_i32_0 = arith.constant 0 : i32
    return %arg0, %c0_i32, %arg1 : i32, i32, i32
  }
  func.func @transform_12(%arg0: i32, %arg1: i32) -> (i32, i32, i32) {
    %c0_i32 = arith.constant 0 : i32
    %c0_i32_0 = arith.constant 0 : i32
    %c0_i32_1 = arith.constant 0 : i32
    return %arg0, %c0_i32, %c0_i32_0 : i32, i32, i32
  }
}

</mosaic_0001>

<llo_original>
// kernel: tpu_custom_call.1
$region0: #{tpu_custom_call.1}
  #allocation0 [shape = 'u32[]', space=smem, size = 0x4, offset = 0x4, fixed_abs, tag = 'smem constant byte address 0x4 - core index']
  #allocation1 [shape = 'u32[144,128]{1,0:T(1,128)}', space=vmem, size = 0x12000, scoped, tag = 'internal scratch']
  #allocation2 [shape = 'f32[8,256]{1,0:T(8,128)}', space=vmem, size = 0x2000, scoped, tag = 'scratch operand']
  #allocation3 [shape = 'f32[8,256]{1,0:T(8,128)}', space=vmem, size = 0x2000, scoped, tag = 'scratch operand']
  #allocation4 [shape = 'f32[8,256]{1,0:T(8,128)}', space=vmem, size = 0x2000, scoped, tag = 'scratch operand']
  %s0 = inlined_call_operand.hbm [shape: f32[2], index: 0, kind: input, shape index: {}]
  %s1 = inlined_call_operand.hbm [shape: f32[2], index: 1, kind: input, shape index: {}]
  %s2 = inlined_call_operand.hbm [shape: f32[2], index: 2, kind: input, shape index: {}]
  %s3 = inlined_call_operand.hbm [shape: f32[2], index: 3, kind: input, shape index: {}]
  %s4 = inlined_call_operand.hbm [shape: f32[2], index: 4, kind: input, shape index: {}]
  %s5 = inlined_call_operand.hbm [shape: f32[2], index: 5, kind: input, shape index: {}]
  %s6 = inlined_call_operand.hbm [shape: f32[8,8], index: 6, kind: input, shape index: {}]
  %s7 = inlined_call_operand.vmem [shape: f32[8,1], index: 7, kind: input, shape index: {}]
  %s8 = inlined_call_operand.vmem [shape: f32[8,1], index: 8, kind: input, shape index: {}]
  %s9 = inlined_call_operand.vmem [shape: f32[8,1], index: 9, kind: input, shape index: {}]
  %s10 = inlined_call_operand.vmem [shape: f32[2,8,256], index: 10, kind: input, shape index: {}]
  %s11 = inlined_call_operand.vmem [shape: f32[2,8,256], index: 11, kind: input, shape index: {}]
  %s12 = inlined_call_operand.vmem [shape: f32[2,1,1], index: 12, kind: output, shape index: {}]
  %s13 = sld [smem:[#allocation0]]
  $region117: #{tpu_custom_call.1} parent=0
    _
  %s15 = ssub.s32 1, %s13
  %s16 = scalar_select 0, %s15, %s13
  $region1: #{tpu_custom_call.1} parent=0
    #allocation5 [shape = 'u8[512]{0}', space=smem, size = 0x200, scoped, tag = 'input window, operand 0, single buffered']
    #allocation6 [shape = 's32[2]{0}', space=sflag, size = 0x8, scoped, tag = 'scoped memory for tpu_custom_call.1']
    #allocation7 [shape = 's32[2]{0}', space=sflag, size = 0x8, scoped, tag = 'scoped memory for tpu_custom_call.1']
    #allocation8 [shape = 'u8[512]{0}', space=smem, size = 0x200, scoped, tag = 'input window, operand 1, single buffered']
    #allocation9 [shape = 's32[1]{0}', space=sflag, size = 0x4, scoped, tag = 'scoped memory for tpu_custom_call.1']
    #allocation10 [shape = 'u8[512]{0}', space=smem, size = 0x200, scoped, tag = 'input window, operand 2, single buffered']
    #allocation11 [shape = 'u8[512]{0}', space=smem, size = 0x200, scoped, tag = 'input window, operand 3, single buffered']
    #allocation12 [shape = 's32[1]{0}', space=sflag, size = 0x4, scoped, tag = 'scoped memory for tpu_custom_call.1']
    #allocation13 [shape = 'u8[512]{0}', space=smem, size = 0x200, scoped, tag = 'input window, operand 4, single buffered']
    #allocation14 [shape = 'u8[512]{0}', space=smem, size = 0x200, scoped, tag = 'input window, operand 5, single buffered']
    #allocation15 [shape = 's32[1]{0}', space=sflag, size = 0x4, scoped, tag = 'scoped memory for tpu_custom_call.1']
    #allocation16 [shape = 'u8[4096]{0}', space=vmem, size = 0x1000, scoped, tag = 'input window, operand 6, single buffered']
    %17 = vsyncpa [#allocation7], 0
    %18 = vsyncpa [#allocation9], 0
    %19 = vsyncpa [#allocation12], 0
    %20 = vsyncpa [#allocation15], 0
    %21 = vsyncpa [#allocation6], 0
    loop: start=0, step=1, limit=4
    $region2: #{tpu_custom_call.1} parent=1 // loop_pre_header
      _
    $region3: #{tpu_custom_call.1} parent=1 // loop_header
      %s23 = sphi 0, %s27
      %p24 = scmp.ge.s32.totalorder %s23, 4
      %s30 = sphi 0, %s42
      %s31 = sphi 0, %s38
      %s32 = sphi 0, %s30
      %s33 = sphi 0, %s31
      %s34 = sphi 0, %s32
      %s35 = sphi 0, %s33
      %s43 = sphi 0, %s43
      %s45 = sphi 0, %s43
      %s46 = sphi 0, %s45
      %s60 = sphi 0, %s46
      %s64 = sphi 0, %s64
      %s66 = sphi 0, %s64
      %s67 = sphi 0, %s66
      %s81 = sphi 0, %s67
      %s85 = sphi 0, %s85
      %s87 = sphi 0, %s85
      %s88 = sphi 0, %s87
      %s102 = sphi 0, %s88
      %s106 = sphi 0, %s106
      %s108 = sphi 0, %s106
      %s109 = sphi 0, %s108
      %s123 = sphi 0, %s109
      %s127 = sphi 0, %s127
      %s129 = sphi 0, %s127
      %s130 = sphi 0, %s129
      %s144 = sphi 0, %s130
      %s148 = sphi 0, %s148
      %s150 = sphi 0, %s148
      %s151 = sphi 0, %s150
      %s165 = sphi 0, %s151
      %s169 = sphi 0, %s169
      %s171 = sphi 0, %s169
      %s172 = sphi 0, %s171
      %s186 = sphi 0, %s172
      %s190 = sphi 0, %s190
      %s192 = sphi 0, %s190
      %s193 = sphi 0, %s192
      %s207 = sphi 0, %s193
      %s211 = sphi 0, %s211
      %s213 = sphi 0, %s211
      %s214 = sphi 0, %s213
      %s228 = sphi 0, %s214
      %s232 = sphi 0, %s232
      %s234 = sphi 0, %s232
      %s235 = sphi 0, %s234
      %s249 = sphi 0, %s235
      %s257 = sphi 0, %s259
      %s260 = sphi 0, %s257
      %s261 = sphi 0, %s260
      %s277 = sphi 0, %s261
      %s285 = sphi 0, %s287
      %s288 = sphi 0, %s285
      %s289 = sphi 0, %s288
      %s305 = sphi 0, %s289
      %s311 = sphi 0, %s313
      %s314 = sphi 0, %s311
      %s315 = sphi 0, %s314
      %s331 = sphi 0, %s315
    $region4: #{tpu_custom_call.1} parent=1 // loop_header_branch
      %26 = sbr.rel (%p24) target = $region8
    $region5: #{tpu_custom_call.1} parent=1 // loop_body
      %s28 = ssub.s32 %s23, 1
      %s29 = ssub.s32 %s23, 2
      %s36 = sadd.s32 1, %s31
      %p37 = scmp.ge.s32.totalorder %s36, 1
      %s38 = scalar_select %p37, 0, %s36
      %s39 = sadd.s32 1, %s30
      %s40 = scalar_select %p37, %s39, %s30
      %p41 = scmp.ge.s32.totalorder %s40, 2
      %s42 = scalar_select %p41, 0, %s40
      %s44 = sadd.s32 %s43, 1
      %p47 = scmp.eq.s32.totalorder %s23, 1
      %p48 = scmp.ne.s32.totalorder %s43, %s45
      %p49 = scmp.eq.s32.totalorder %s23, 0
      %p50 = por %p48, %p49
      %p51 = scmp.ne.s32.totalorder %s43, %s45
      %p52 = scmp.eq.s32.totalorder %s28, 1
      %p53 = por %p51, %p52
      %p54 = scmp.ne.s32.totalorder %s45, %s46
      %p55 = scmp.eq.s32.totalorder %s28, 0
      %p56 = por %p54, %p55
      %p57 = scmp.ne.s32.totalorder %s45, %s46
      %p58 = scmp.eq.s32.totalorder %s29, 1
      %p59 = por %p57, %p58
      %p61 = scmp.ne.s32.totalorder %s46, %s60
      %p62 = scmp.eq.s32.totalorder %s29, 0
      %p63 = por %p61, %p62
      %s65 = sadd.s32 %s64, 1
      %p68 = scmp.eq.s32.totalorder %s23, 1
      %p69 = scmp.ne.s32.totalorder %s64, %s66
      %p70 = scmp.eq.s32.totalorder %s23, 0
      %p71 = por %p69, %p70
      %p72 = scmp.ne.s32.totalorder %s64, %s66
      %p73 = scmp.eq.s32.totalorder %s28, 1
      %p74 = por %p72, %p73
      %p75 = scmp.ne.s32.totalorder %s66, %s67
      %p76 = scmp.eq.s32.totalorder %s28, 0
      %p77 = por %p75, %p76
      %p78 = scmp.ne.s32.totalorder %s66, %s67
      %p79 = scmp.eq.s32.totalorder %s29, 1
      %p80 = por %p78, %p79
      %p82 = scmp.ne.s32.totalorder %s67, %s81
      %p83 = scmp.eq.s32.totalorder %s29, 0
      %p84 = por %p82, %p83
      %s86 = sadd.s32 %s85, 1
      %p89 = scmp.eq.s32.totalorder %s23, 1
      %p90 = scmp.ne.s32.totalorder %s85, %s87
      %p91 = scmp.eq.s32.totalorder %s23, 0
      %p92 = por %p90, %p91
      %p93 = scmp.ne.s32.totalorder %s85, %s87
      %p94 = scmp.eq.s32.totalorder %s28, 1
      %p95 = por %p93, %p94
      %p96 = scmp.ne.s32.totalorder %s87, %s88
      %p97 = scmp.eq.s32.totalorder %s28, 0
      %p98 = por %p96, %p97
      %p99 = scmp.ne.s32.totalorder %s87, %s88
      %p100 = scmp.eq.s32.totalorder %s29, 1
      %p101 = por %p99, %p100
      %p103 = scmp.ne.s32.totalorder %s88, %s102
      %p104 = scmp.eq.s32.totalorder %s29, 0
      %p105 = por %p103, %p104
      %s107 = sadd.s32 %s106, 1
      %p110 = scmp.eq.s32.totalorder %s23, 1
      %p111 = scmp.ne.s32.totalorder %s106, %s108
      %p112 = scmp.eq.s32.totalorder %s23, 0
      %p113 = por %p111, %p112
      %p114 = scmp.ne.s32.totalorder %s106, %s108
      %p115 = scmp.eq.s32.totalorder %s28, 1
      %p116 = por %p114, %p115
      %p117 = scmp.ne.s32.totalorder %s108, %s109
      %p118 = scmp.eq.s32.totalorder %s28, 0
      %p119 = por %p117, %p118
      %p120 = scmp.ne.s32.totalorder %s108, %s109
      %p121 = scmp.eq.s32.totalorder %s29, 1
      %p122 = por %p120, %p121
      %p124 = scmp.ne.s32.totalorder %s109, %s123
      %p125 = scmp.eq.s32.totalorder %s29, 0
      %p126 = por %p124, %p125
      %s128 = sadd.s32 %s127, 1
      %p131 = scmp.eq.s32.totalorder %s23, 1
      %p132 = scmp.ne.s32.totalorder %s127, %s129
      %p133 = scmp.eq.s32.totalorder %s23, 0
      %p134 = por %p132, %p133
      %p135 = scmp.ne.s32.totalorder %s127, %s129
      %p136 = scmp.eq.s32.totalorder %s28, 1
      %p137 = por %p135, %p136
      %p138 = scmp.ne.s32.totalorder %s129, %s130
      %p139 = scmp.eq.s32.totalorder %s28, 0
      %p140 = por %p138, %p139
      %p141 = scmp.ne.s32.totalorder %s129, %s130
      %p142 = scmp.eq.s32.totalorder %s29, 1
      %p143 = por %p141, %p142
      %p145 = scmp.ne.s32.totalorder %s130, %s144
      %p146 = scmp.eq.s32.totalorder %s29, 0
      %p147 = por %p145, %p146
      %s149 = sadd.s32 %s148, 1
      %p152 = scmp.eq.s32.totalorder %s23, 1
      %p153 = scmp.ne.s32.totalorder %s148, %s150
      %p154 = scmp.eq.s32.totalorder %s23, 0
      %p155 = por %p153, %p154
      %p156 = scmp.ne.s32.totalorder %s148, %s150
      %p157 = scmp.eq.s32.totalorder %s28, 1
      %p158 = por %p156, %p157
      %p159 = scmp.ne.s32.totalorder %s150, %s151
      %p160 = scmp.eq.s32.totalorder %s28, 0
      %p161 = por %p159, %p160
      %p162 = scmp.ne.s32.totalorder %s150, %s151
      %p163 = scmp.eq.s32.totalorder %s29, 1
      %p164 = por %p162, %p163
      %p166 = scmp.ne.s32.totalorder %s151, %s165
      %p167 = scmp.eq.s32.totalorder %s29, 0
      %p168 = por %p166, %p167
      %s170 = sadd.s32 %s169, 1
      %p173 = scmp.eq.s32.totalorder %s23, 1
      %p174 = scmp.ne.s32.totalorder %s169, %s171
      %p175 = scmp.eq.s32.totalorder %s23, 0
      %p176 = por %p174, %p175
      %p177 = scmp.ne.s32.totalorder %s169, %s171
      %p178 = scmp.eq.s32.totalorder %s28, 1
      %p179 = por %p177, %p178
      %p180 = scmp.ne.s32.totalorder %s171, %s172
      %p181 = scmp.eq.s32.totalorder %s28, 0
      %p182 = por %p180, %p181
      %p183 = scmp.ne.s32.totalorder %s171, %s172
      %p184 = scmp.eq.s32.totalorder %s29, 1
      %p185 = por %p183, %p184
      %p187 = scmp.ne.s32.totalorder %s172, %s186
      %p188 = scmp.eq.s32.totalorder %s29, 0
      %p189 = por %p187, %p188
      %s191 = sadd.s32 %s190, 1
      %p194 = scmp.eq.s32.totalorder %s23, 1
      %p195 = scmp.ne.s32.totalorder %s190, %s192
      %p196 = scmp.eq.s32.totalorder %s23, 0
      %p197 = por %p195, %p196
      %p198 = scmp.ne.s32.totalorder %s190, %s192
      %p199 = scmp.eq.s32.totalorder %s28, 1
      %p200 = por %p198, %p199
      %p201 = scmp.ne.s32.totalorder %s192, %s193
      %p202 = scmp.eq.s32.totalorder %s28, 0
      %p203 = por %p201, %p202
      %p204 = scmp.ne.s32.totalorder %s192, %s193
      %p205 = scmp.eq.s32.totalorder %s29, 1
      %p206 = por %p204, %p205
      %p208 = scmp.ne.s32.totalorder %s193, %s207
      %p209 = scmp.eq.s32.totalorder %s29, 0
      %p210 = por %p208, %p209
      %s212 = sadd.s32 %s211, 1
      %p215 = scmp.eq.s32.totalorder %s23, 1
      %p216 = scmp.ne.s32.totalorder %s211, %s213
      %p217 = scmp.eq.s32.totalorder %s23, 0
      %p218 = por %p216, %p217
      %p219 = scmp.ne.s32.totalorder %s211, %s213
      %p220 = scmp.eq.s32.totalorder %s28, 1
      %p221 = por %p219, %p220
      %p222 = scmp.ne.s32.totalorder %s213, %s214
      %p223 = scmp.eq.s32.totalorder %s28, 0
      %p224 = por %p222, %p223
      %p225 = scmp.ne.s32.totalorder %s213, %s214
      %p226 = scmp.eq.s32.totalorder %s29, 1
      %p227 = por %p225, %p226
      %p229 = scmp.ne.s32.totalorder %s214, %s228
      %p230 = scmp.eq.s32.totalorder %s29, 0
      %p231 = por %p229, %p230
      %s233 = sadd.s32 %s232, 1
      %p236 = scmp.eq.s32.totalorder %s23, 1
      %p237 = scmp.ne.s32.totalorder %s232, %s234
      %p238 = scmp.eq.s32.totalorder %s23, 0
      %p239 = por %p237, %p238
      %p240 = scmp.ne.s32.totalorder %s232, %s234
      %p241 = scmp.eq.s32.totalorder %s28, 1
      %p242 = por %p240, %p241
      %p243 = scmp.ne.s32.totalorder %s234, %s235
      %p244 = scmp.eq.s32.totalorder %s28, 0
      %p245 = por %p243, %p244
      %p246 = scmp.ne.s32.totalorder %s234, %s235
      %p247 = scmp.eq.s32.totalorder %s29, 1
      %p248 = por %p246, %p247
      %p250 = scmp.ne.s32.totalorder %s235, %s249
      %p251 = scmp.eq.s32.totalorder %s29, 0
      %p252 = por %p250, %p251
      %s253 = ssub.s32 %s30, %s42
      %s254 = ssub.s32 %s31, %s38
      %s255 = sor.u32 %s253, %s254
      %p256 = scmp.eq.s32.totalorder %s255, 0
      %s258 = sadd.s32 %s257, 1
      %s259 = scalar_select %p256, %s257, %s258
      %p262 = pneg %p256
      %p263 = scmp.eq.s32.totalorder %s23, 1
      %p264 = por %p262, %p263
      %p265 = scmp.ne.s32.totalorder %s257, %s260
      %p266 = scmp.eq.s32.totalorder %s23, 0
      %p267 = por %p265, %p266
      %p268 = scmp.ne.s32.totalorder %s257, %s260
      %p269 = scmp.eq.s32.totalorder %s28, 1
      %p270 = por %p268, %p269
      %p271 = scmp.ne.s32.totalorder %s260, %s261
      %p272 = scmp.eq.s32.totalorder %s28, 0
      %p273 = por %p271, %p272
      %p274 = scmp.ne.s32.totalorder %s260, %s261
      %p275 = scmp.eq.s32.totalorder %s29, 1
      %p276 = por %p274, %p275
      %p278 = scmp.ne.s32.totalorder %s261, %s277
      %p279 = scmp.eq.s32.totalorder %s29, 0
      %p280 = por %p278, %p279
      %s281 = ssub.s32 %s30, %s42
      %s282 = ssub.s32 %s31, %s38
      %s283 = sor.u32 %s281, %s282
      %p284 = scmp.eq.s32.totalorder %s283, 0
      %s286 = sadd.s32 %s285, 1
      %s287 = scalar_select %p284, %s285, %s286
      %p290 = pneg %p284
      %p291 = scmp.eq.s32.totalorder %s23, 1
      %p292 = por %p290, %p291
      %p293 = scmp.ne.s32.totalorder %s285, %s288
      %p294 = scmp.eq.s32.totalorder %s23, 0
      %p295 = por %p293, %p294
      %p296 = scmp.ne.s32.totalorder %s285, %s288
      %p297 = scmp.eq.s32.totalorder %s28, 1
      %p298 = por %p296, %p297
      %p299 = scmp.ne.s32.totalorder %s288, %s289
      %p300 = scmp.eq.s32.totalorder %s28, 0
      %p301 = por %p299, %p300
      %p302 = scmp.ne.s32.totalorder %s288, %s289
      %p303 = scmp.eq.s32.totalorder %s29, 1
      %p304 = por %p302, %p303
      %p306 = scmp.ne.s32.totalorder %s289, %s305
      %p307 = scmp.eq.s32.totalorder %s29, 0
      %p308 = por %p306, %p307
      %s309 = ssub.s32 %s30, %s42
      %p310 = scmp.eq.s32.totalorder %s309, 0
      %s312 = sadd.s32 %s311, 1
      %s313 = scalar_select %p310, %s311, %s312
      %p316 = pneg %p310
      %p317 = scmp.eq.s32.totalorder %s23, 1
      %p318 = por %p316, %p317
      %p319 = scmp.ne.s32.totalorder %s311, %s314
      %p320 = scmp.eq.s32.totalorder %s23, 0
      %p321 = por %p319, %p320
      %p322 = scmp.ne.s32.totalorder %s311, %s314
      %p323 = scmp.eq.s32.totalorder %s28, 1
      %p324 = por %p322, %p323
      %p325 = scmp.ne.s32.totalorder %s314, %s315
      %p326 = scmp.eq.s32.totalorder %s28, 0
      %p327 = por %p325, %p326
      %p328 = scmp.ne.s32.totalorder %s314, %s315
      %p329 = scmp.eq.s32.totalorder %s29, 1
      %p330 = por %p328, %p329
      %p332 = scmp.ne.s32.totalorder %s315, %s331
      %p333 = scmp.eq.s32.totalorder %s29, 0
      %p334 = por %p332, %p333
      %p335 = scmp.le.s32.totalorder 1, %s23
      %p336 = scmp.lt.s32.totalorder %s23, 3
      %p337 = pnand %p335, %p336
      %p338 = pneg %p337
      // Predicated region
      $region9: #{tpu_custom_call.1} parent=5 // pred_check
        _
      $region10: #{tpu_custom_call.1} parent=5 // pred_check_branch
        %340 = sbr.rel (%p337) target = $region12
      $region11: #{tpu_custom_call.1} parent=5 // pred_region
        %s341 = ssub.s32 %s23, 1
        // Predicated region
        $region13: #{tpu_custom_call.1} parent=11 // pred_check
          %p342 = pneg %p56
        $region14: #{tpu_custom_call.1} parent=11 // pred_check_branch
          %344 = sbr.rel (%p342) target = $region16
        $region15: #{tpu_custom_call.1} parent=11 // pred_region
          %s346 = ssub.s32 16, 16
          %347 = vsyncadd [#allocation7], %s346
          %350 = dma.hbm_to_smem %s0, 16, [#allocation5], [#allocation7]
        $region16: #{tpu_custom_call.1} parent=11 // pred_fallthru
          _
        // Predicated region
        $region17: #{tpu_custom_call.1} parent=11 // pred_check
          %p351 = pneg %p77
        $region18: #{tpu_custom_call.1} parent=11 // pred_check_branch
          %353 = sbr.rel (%p351) target = $region20
        $region19: #{tpu_custom_call.1} parent=11 // pred_region
          %s355 = ssub.s32 16, 16
          %356 = vsyncadd [#allocation9], %s355
          %359 = dma.hbm_to_smem %s1, 16, [#allocation8], [#allocation9]
        $region20: #{tpu_custom_call.1} parent=11 // pred_fallthru
          _
        // Predicated region
        $region21: #{tpu_custom_call.1} parent=11 // pred_check
          %p360 = pneg %p98
        $region22: #{tpu_custom_call.1} parent=11 // pred_check_branch
          %362 = sbr.rel (%p360) target = $region24
        $region23: #{tpu_custom_call.1} parent=11 // pred_region
          %s364 = ssub.s32 16, 16
          %365 = vsyncadd [#allocation9], %s364
          %368 = dma.hbm_to_smem %s2, 16, [#allocation10], [#allocation9]
        $region24: #{tpu_custom_call.1} parent=11 // pred_fallthru
          _
        // Predicated region
        $region25: #{tpu_custom_call.1} parent=11 // pred_check
          %p369 = pneg %p119
        $region26: #{tpu_custom_call.1} parent=11 // pred_check_branch
          %371 = sbr.rel (%p369) target = $region28
        $region27: #{tpu_custom_call.1} parent=11 // pred_region
          %s373 = ssub.s32 16, 16
          %374 = vsyncadd [#allocation12], %s373
          %377 = dma.hbm_to_smem %s3, 16, [#allocation11], [#allocation12]
        $region28: #{tpu_custom_call.1} parent=11 // pred_fallthru
          _
        // Predicated region
        $region29: #{tpu_custom_call.1} parent=11 // pred_check
          %p378 = pneg %p140
        $region30: #{tpu_custom_call.1} parent=11 // pred_check_branch
          %380 = sbr.rel (%p378) target = $region32
        $region31: #{tpu_custom_call.1} parent=11 // pred_region
          %s382 = ssub.s32 16, 16
          %383 = vsyncadd [#allocation12], %s382
          %386 = dma.hbm_to_smem %s4, 16, [#allocation13], [#allocation12]
        $region32: #{tpu_custom_call.1} parent=11 // pred_fallthru
          _
        // Predicated region
        $region33: #{tpu_custom_call.1} parent=11 // pred_check
          %p387 = pneg %p161
        $region34: #{tpu_custom_call.1} parent=11 // pred_check_branch
          %389 = sbr.rel (%p387) target = $region36
        $region35: #{tpu_custom_call.1} parent=11 // pred_region
          %s391 = ssub.s32 16, 16
          %392 = vsyncadd [#allocation15], %s391
          %395 = dma.hbm_to_smem %s5, 16, [#allocation14], [#allocation15]
        $region36: #{tpu_custom_call.1} parent=11 // pred_fallthru
          _
        // Predicated region
        $region37: #{tpu_custom_call.1} parent=11 // pred_check
          %p396 = pneg %p182
        $region38: #{tpu_custom_call.1} parent=11 // pred_check_branch
          %398 = sbr.rel (%p396) target = $region40
        $region39: #{tpu_custom_call.1} parent=11 // pred_region
          %s400 = ssub.s32 128, 128
          %401 = vsyncadd [#allocation6], %s400
          %s403 = sshll.u32 [#allocation16], 4
          %s404 = int_to_ptr.vmem [resolvable:$true] %s403
          %406 = dma.hbm_to_vmem [thread:$0]  %s6, 128, %s404, [#allocation6]
        $region40: #{tpu_custom_call.1} parent=11 // pred_fallthru
          _
        // Predicated region
        $region41: #{tpu_custom_call.1} parent=11 // pred_check
          %p407 = pneg %p203
        $region42: #{tpu_custom_call.1} parent=11 // pred_check_branch
          %409 = sbr.rel (%p407) target = $region44
        $region43: #{tpu_custom_call.1} parent=11 // pred_region
          _
        $region44: #{tpu_custom_call.1} parent=11 // pred_fallthru
          _
        // Predicated region
        $region45: #{tpu_custom_call.1} parent=11 // pred_check
          %p410 = pneg %p224
        $region46: #{tpu_custom_call.1} parent=11 // pred_check_branch
          %412 = sbr.rel (%p410) target = $region48
        $region47: #{tpu_custom_call.1} parent=11 // pred_region
          _
        $region48: #{tpu_custom_call.1} parent=11 // pred_fallthru
          _
        // Predicated region
        $region49: #{tpu_custom_call.1} parent=11 // pred_check
          %p413 = pneg %p245
        $region50: #{tpu_custom_call.1} parent=11 // pred_check_branch
          %415 = sbr.rel (%p413) target = $region52
        $region51: #{tpu_custom_call.1} parent=11 // pred_region
          _
        $region52: #{tpu_custom_call.1} parent=11 // pred_fallthru
          _
      $region12: #{tpu_custom_call.1} parent=5 // pred_fallthru
        _
      %p416 = scmp.lt.s32.totalorder %s23, 2
      // Predicated region
      $region53: #{tpu_custom_call.1} parent=5 // pred_check
        %p417 = pneg %p416
      $region54: #{tpu_custom_call.1} parent=5 // pred_check_branch
        %419 = sbr.rel (%p417) target = $region56
      $region55: #{tpu_custom_call.1} parent=5 // pred_region
        // Predicated region
        $region57: #{tpu_custom_call.1} parent=55 // pred_check
          %p420 = pneg %p267
        $region58: #{tpu_custom_call.1} parent=55 // pred_check_branch
          %422 = sbr.rel (%p420) target = $region60
        $region59: #{tpu_custom_call.1} parent=55 // pred_region
          %s423 = smul.u32 2, %s31
          %p424 = scmp.lt.s32.totalorder %s30, 1
          %s425 = scalar_select %p424, %s30, 1
          %p426 = scmp.lt.s32.totalorder %s423, 1
          %s427 = scalar_select %p426, %s423, 1
          %s428 = smul.addr %s425, 2
          %s429 = sadd.s32 %s427, %s428
          %s430 = smul.addr %s429, 8
          %s431 = scalar_lea.vmem %s10, %s430
          %s432 = smul.u32 2, %s31
        $region60: #{tpu_custom_call.1} parent=55 // pred_fallthru
          _
        // Predicated region
        $region61: #{tpu_custom_call.1} parent=55 // pred_check
          %p433 = pneg %p295
        $region62: #{tpu_custom_call.1} parent=55 // pred_check_branch
          %435 = sbr.rel (%p433) target = $region64
        $region63: #{tpu_custom_call.1} parent=55 // pred_region
          %s436 = smul.u32 2, %s31
          %p437 = scmp.lt.s32.totalorder %s30, 1
          %s438 = scalar_select %p437, %s30, 1
          %p439 = scmp.lt.s32.totalorder %s436, 1
          %s440 = scalar_select %p439, %s436, 1
          %s441 = smul.addr %s438, 2
          %s442 = sadd.s32 %s440, %s441
          %s443 = smul.addr %s442, 8
          %s444 = scalar_lea.vmem %s11, %s443
          %s445 = smul.u32 2, %s31
        $region64: #{tpu_custom_call.1} parent=55 // pred_fallthru
          _
      $region56: #{tpu_custom_call.1} parent=5 // pred_fallthru
        _
      %p446 = scmp.le.s32.totalorder 1, %s23
      %p447 = scmp.lt.s32.totalorder %s23, 3
      %p448 = pnand %p446, %p447
      %p449 = pneg %p448
      // Predicated region
      $region65: #{tpu_custom_call.1} parent=5 // pred_check
        _
      $region66: #{tpu_custom_call.1} parent=5 // pred_check_branch
        %451 = sbr.rel (%p448) target = $region68
      $region67: #{tpu_custom_call.1} parent=5 // pred_region
        %s452 = ssub.s32 %s23, 1
        // Predicated region
        $region69: #{tpu_custom_call.1} parent=67 // pred_check
          %p453 = pneg %p56
        $region70: #{tpu_custom_call.1} parent=67 // pred_check_branch
          %455 = sbr.rel (%p453) target = $region72
        $region71: #{tpu_custom_call.1} parent=67 // pred_region
          %456 = dma.done [#allocation7], 16
        $region72: #{tpu_custom_call.1} parent=67 // pred_fallthru
          _
        // Predicated region
        $region73: #{tpu_custom_call.1} parent=67 // pred_check
          %p457 = pneg %p77
        $region74: #{tpu_custom_call.1} parent=67 // pred_check_branch
          %459 = sbr.rel (%p457) target = $region76
        $region75: #{tpu_custom_call.1} parent=67 // pred_region
          %460 = dma.done [#allocation9], 16
        $region76: #{tpu_custom_call.1} parent=67 // pred_fallthru
          _
        // Predicated region
        $region77: #{tpu_custom_call.1} parent=67 // pred_check
          %p461 = pneg %p98
        $region78: #{tpu_custom_call.1} parent=67 // pred_check_branch
          %463 = sbr.rel (%p461) target = $region80
        $region79: #{tpu_custom_call.1} parent=67 // pred_region
          %464 = dma.done [#allocation9], 16
        $region80: #{tpu_custom_call.1} parent=67 // pred_fallthru
          _
        // Predicated region
        $region81: #{tpu_custom_call.1} parent=67 // pred_check
          %p465 = pneg %p119
        $region82: #{tpu_custom_call.1} parent=67 // pred_check_branch
          %467 = sbr.rel (%p465) target = $region84
        $region83: #{tpu_custom_call.1} parent=67 // pred_region
          %468 = dma.done [#allocation12], 16
        $region84: #{tpu_custom_call.1} parent=67 // pred_fallthru
          _
        // Predicated region
        $region85: #{tpu_custom_call.1} parent=67 // pred_check
          %p469 = pneg %p140
        $region86: #{tpu_custom_call.1} parent=67 // pred_check_branch
          %471 = sbr.rel (%p469) target = $region88
        $region87: #{tpu_custom_call.1} parent=67 // pred_region
          %472 = dma.done [#allocation12], 16
        $region88: #{tpu_custom_call.1} parent=67 // pred_fallthru
          _
        // Predicated region
        $region89: #{tpu_custom_call.1} parent=67 // pred_check
          %p473 = pneg %p161
        $region90: #{tpu_custom_call.1} parent=67 // pred_check_branch
          %475 = sbr.rel (%p473) target = $region92
        $region91: #{tpu_custom_call.1} parent=67 // pred_region
          %476 = dma.done [#allocation15], 16
        $region92: #{tpu_custom_call.1} parent=67 // pred_fallthru
          _
        // Predicated region
        $region93: #{tpu_custom_call.1} parent=67 // pred_check
          %p477 = pneg %p182
        $region94: #{tpu_custom_call.1} parent=67 // pred_check_branch
          %479 = sbr.rel (%p477) target = $region96
        $region95: #{tpu_custom_call.1} parent=67 // pred_region
          %480 = dma.done [#allocation6], 128
        $region96: #{tpu_custom_call.1} parent=67 // pred_fallthru
          _
        %481 = sfence
        %p482 = pneg %p56
        %p483 = pneg %p53
        %p484 = pneg %p77
        %p485 = pneg %p74
        %p486 = pneg %p98
        %p487 = pneg %p95
        %p488 = pneg %p119
        %p489 = pneg %p116
        %p490 = pneg %p140
        %p491 = pneg %p137
        %p492 = pneg %p161
        %p493 = pneg %p158
        %p494 = pneg %p182
        %p495 = pneg %p179
        %p496 = pneg %p203
        %p497 = pneg %p200
        %p498 = pneg %p224
        %p499 = pneg %p221
        %p500 = pneg %p245
        %p501 = pneg %p242
        %s502 = smul.u32 2, %s33
        %p503 = scmp.lt.s32.totalorder %s32, 1
        %s504 = scalar_select %p503, %s32, 1
        %p505 = scmp.lt.s32.totalorder %s502, 1
        %s506 = scalar_select %p505, %s502, 1
        %s507 = smul.addr %s504, 2
        %s508 = sadd.s32 %s506, %s507
        %s509 = smul.addr %s508, 8
        %s510 = scalar_lea.vmem %s10, %s509
        %p511 = pneg %p273
        %p512 = pneg %p270
        %s513 = smul.u32 2, %s33
        %p514 = scmp.lt.s32.totalorder %s32, 1
        %s515 = scalar_select %p514, %s32, 1
        %p516 = scmp.lt.s32.totalorder %s513, 1
        %s517 = scalar_select %p516, %s513, 1
        %s518 = smul.addr %s515, 2
        %s519 = sadd.s32 %s517, %s518
        %s520 = smul.addr %s519, 8
        %s521 = scalar_lea.vmem %s11, %s520
        %p522 = pneg %p301
        %p523 = pneg %p298
        %p524 = pneg %p327
        %p525 = pneg %p324
        %p526 = scmp.lt.s32.totalorder %s32, 1
        %s527 = scalar_select %p526, %s32, 1
        %s528 = scalar_lea.vmem %s12, %s527
        %s529 = smul.u32 2, %s33
        %p530 = scmp.lt.s32.totalorder %s32, 1
        %s531 = scalar_select %p530, %s32, 1
        %p532 = scmp.lt.s32.totalorder %s529, 1
        %s533 = scalar_select %p532, %s529, 1
        %s534 = smul.addr %s531, 2
        %s535 = sadd.s32 %s533, %s534
        %s536 = smul.addr %s535, 8
        %s537 = scalar_lea.vmem %s10, %s536
        %s538 = smul.u32 2, %s33
        %s539 = smul.u32 2, %s33
        %p540 = scmp.lt.s32.totalorder %s32, 1
        %s541 = scalar_select %p540, %s32, 1
        %p542 = scmp.lt.s32.totalorder %s539, 1
        %s543 = scalar_select %p542, %s539, 1
        %s544 = smul.addr %s541, 2
        %s545 = sadd.s32 %s543, %s544
        %s546 = smul.addr %s545, 8
        %s547 = scalar_lea.vmem %s11, %s546
        %s548 = smul.u32 2, %s33
        %p549 = scmp.lt.s32.totalorder %s32, 1
        %s550 = scalar_select %p549, %s32, 1
        %s551 = scalar_lea.vmem %s12, %s550
        %p552 = scmp.eq.s32.totalorder %s33, 0
        // Predicated region
        $region97: #{tpu_custom_call.1} parent=67 // pred_check
          %p553 = pneg %p552
        $region98: #{tpu_custom_call.1} parent=67 // pred_check_branch
          %555 = sbr.rel (%p553) target = $region100
        $region99: #{tpu_custom_call.1} parent=67 // pred_region
          %556 = vst [vmem:[#allocation2] sm:$0xff] 0.0
          %557 = vst [vmem:[#allocation2 + $0x8] sm:$0xff] 0.0
          %558 = vst [vmem:[#allocation3] sm:$0xff] 0.0
          %559 = vst [vmem:[#allocation3 + $0x8] sm:$0xff] 0.0
          %560 = vst [vmem:[#allocation4] sm:$0xff] 0.0
          %561 = vst [vmem:[#allocation4 + $0x8] sm:$0xff] 0.0
        $region100: #{tpu_custom_call.1} parent=67 // pred_fallthru
          _
        %s562 = sld [smem:[#allocation5 + %s32]]
        %s563 = sld [smem:[#allocation8 + %s32]]
        %s564 = sld [smem:[#allocation13 + %s32]]
        %v565 = vld [vmem:[%s537] sm:$0xff]
        %v566 = vld [vmem:[%s537 + $0x8] sm:$0xff]
        %v567 = vmul.f32 %v565, 2.0
        %v568 = vmul.f32 %v566, 2.0
        %v569 = vsub.f32 %v567, 1.0
        %v570 = vsub.f32 %v568, 1.0
        %v571 = vld [vmem:[%s547] sm:$0xff]
        %v572 = vld [vmem:[%s547 + $0x8] sm:$0xff]
        %v573 = vstv %s562
        %v574 = vmul.f32 %v573, %v569
        %v575 = vmul.f32 %v573, %v570
        %v576 = vstv %s563
        %v577 = vmul.f32 %v576, %v571
        %v578 = vmul.f32 %v576, %v572
        %v579 = vadd.f32 %v574, %v577
        %v580 = vadd.f32 %v575, %v578
        %v581 = vmul.f32 %v573, %v571
        %v582 = vmul.f32 %v573, %v572
        %v583 = vmul.f32 %v576, %v569
        %v584 = vmul.f32 %v576, %v570
        %v585 = vsub.f32 %v581, %v583
        %v586 = vsub.f32 %v582, %v584
        %v587 = vld [vmem:[#allocation16] sm:$0xff]
        %v588 = vld [vmem:[%s7] sm:$0xff]
        %590 = vset.pattern.permute.xlu0 0
        %591 = vperm.xlu0 %590, %v588
        %v592 = vpop.permute.xlu0 %591
        %vm594 = vcmask 64512
        %v596 = vsel %vm594, %v587, 0
        %598 = vmatprep.subr.mxu0 %v580
        %599 = vmatpush1.msra.mxu0 %v579
        %600 = vmatprep.subr.mxu0 0.0
        %601 = vmatpush1.msra.mxu0 0.0
        %602 = vmatprep.subr.mxu0 0.0
        %603 = vmatpush1.msra.mxu0 0.0
        %604 = vmatprep.subr.mxu0 0.0
        %605 = vmatpush1.msra.mxu0 0.0
        %606 = vmatprep.subr.mxu0 0.0
        %607 = vmatpush1.msra.mxu0 0.0
        %608 = vmatprep.subr.mxu0 0.0
        %609 = vmatpush1.msra.mxu0 0.0
        %610 = vmatprep.subr.mxu0 0.0
        %611 = vmatpush1.msra.mxu0 0.0
        %612 = vmatprep.subr.mxu0 0.0
        %613 = vmatpush1.msra.mxu0 0.0
        %614 = vmatprep.subr.mxu0 0.0
        %615 = vmatpush1.msra.mxu0 0.0
        %616 = vmatprep.subr.mxu0 0.0
        %617 = vmatpush1.msra.mxu0 0.0
        %618 = vmatprep.subr.mxu0 0.0
        %619 = vmatpush1.msra.mxu0 0.0
        %620 = vmatprep.subr.mxu0 0.0
        %621 = vmatpush1.msra.mxu0 0.0
        %622 = vmatprep.subr.mxu0 0.0
        %623 = vmatpush1.msra.mxu0 0.0
        %624 = vmatprep.subr.mxu0 0.0
        %625 = vmatpush1.msra.mxu0 0.0
        %626 = vmatprep.subr.mxu0 0.0
        %627 = vmatpush1.msra.mxu0 0.0
        %628 = vmatprep.subr.mxu0 0.0
        %629 = vmatpush1.msra.mxu0 0.0
        %630 = vmatprep.subr.mxu0 0.0
        %631 = vmatpush1.msra.mxu0 0.0
        %632 = vmatprep.subr.mxu0 0.0
        %633 = vmatpush1.msra.mxu0 0.0
        %634 = vmatprep.subr.mxu0 0.0
        %635 = vmatpush1.msra.mxu0 0.0
        %636 = vmatprep.subr.mxu0 0.0
        %637 = vmatpush1.msra.mxu0 0.0
        %638 = vmatprep.subr.mxu0 0.0
        %639 = vmatpush1.msra.mxu0 0.0
        %640 = vmatprep.subr.mxu0 0.0
        %641 = vmatpush1.msra.mxu0 0.0
        %642 = vmatprep.subr.mxu0 0.0
        %643 = vmatpush1.msra.mxu0 0.0
        %644 = vmatprep.subr.mxu0 0.0
        %645 = vmatpush1.msra.mxu0 0.0
        %646 = vmatprep.subr.mxu0 0.0
        %647 = vmatpush1.msra.mxu0 0.0
        %648 = vmatprep.subr.mxu0 0.0
        %649 = vmatpush1.msra.mxu0 0.0
        %650 = vmatprep.subr.mxu0 0.0
        %651 = vmatpush1.msra.mxu0 0.0
        %652 = vmatprep.subr.mxu0 0.0
        %653 = vmatpush1.msra.mxu0 0.0
        %654 = vmatprep.subr.mxu0 0.0
        %655 = vmatpush1.msra.mxu0 0.0
        %656 = vmatprep.subr.mxu0 0.0
        %657 = vmatpush1.msra.mxu0 0.0
        %658 = vmatprep.subr.mxu0 0.0
        %659 = vmatpush1.msra.mxu0 0.0
        %660 = vmatprep.subr.mxu0 0.0
        %661 = vmatpush1.msra.mxu0 0.0
        %662 = vmatprep.mubr.f32.mxu0 0.0
        %663 = vmatmul.mubr.f32.gmra.mrb[0].mxu0 %v596
        %v664 = vpop.f32.mrb[0].mxu0
        %v665 = vadd.f32 %v592, %v664
        %v666 = vpop.f32.mrb[0].mxu0
        %v667 = vadd.f32 %v592, %v666
        %668 = vdwg.mxu0
        %v669 = vld [vmem:[%s8] sm:$0xff]
        %v670 = vstv %s564
        %v671 = vmul.f32 %v670, %v669
        %673 = vset.pattern.permute.xlu0 0
        %674 = vperm.xlu0 %673, %v671
        %v675 = vpop.permute.xlu0 %674
        %v677 = vadd.f32 %v665, %v675
        %v678 = vadd.f32 %v667, %v675
        %v679 = vsub.f32 %v677, %v585
        %v680 = vsub.f32 %v678, %v586
        %v681 = vld [vmem:[#allocation2] sm:$0xff]
        %v682 = vld [vmem:[#allocation2 + $0x8] sm:$0xff]
        %v683 = vadd.f32 %v681, %v579
        %v684 = vadd.f32 %v682, %v580
        %685 = vst [vmem:[#allocation2] sm:$0xff] %v683
        %686 = vst [vmem:[#allocation2 + $0x8] sm:$0xff] %v684
        %v687 = vld [vmem:[#allocation3] sm:$0xff]
        %v688 = vld [vmem:[#allocation3 + $0x8] sm:$0xff]
        %v689 = vadd.f32 %v687, %v679
        %v690 = vadd.f32 %v688, %v680
        %691 = vst [vmem:[#allocation3] sm:$0xff] %v689
        %692 = vst [vmem:[#allocation3 + $0x8] sm:$0xff] %v690
        %v693 = vld [vmem:[#allocation4] sm:$0xff]
        %v694 = vld [vmem:[#allocation4 + $0x8] sm:$0xff]
        %v695 = vmul.f32 %v679, %v679
        %v696 = vmul.f32 %v680, %v680
        %v697 = vadd.f32 %v693, %v695
        %v698 = vadd.f32 %v694, %v696
        %699 = vst [vmem:[#allocation4] sm:$0xff] %v697
        %700 = vst [vmem:[#allocation4 + $0x8] sm:$0xff] %v698
        // Predicated region
        $region101: #{tpu_custom_call.1} parent=67 // pred_check
          %p701 = pneg %p552
        $region102: #{tpu_custom_call.1} parent=67 // pred_check_branch
          %703 = sbr.rel (%p701) target = $region104
        $region103: #{tpu_custom_call.1} parent=67 // pred_region
          %v704 = vld [vmem:[%s9] sm:$0xff]
          %v705 = vld [vmem:[#allocation2] sm:$0xff]
          %v706 = vld [vmem:[#allocation2 + $0x8] sm:$0xff]
          %v707 = vadd.f32 %v705, %v706
          %708 = vadd.xlane.f32.xlu0 %v707
          %v709 = vpop.xlane.xlu0 %708
          %v710 = vrot.slane %v709, 4
          %v711 = vadd.f32 %v709, %v710
          %v712 = vrot.slane %v711, 2
          %v713 = vadd.f32 %v711, %v712
          %v714 = vrot.slane %v713, 1
          %v715 = vadd.f32 %v713, %v714
          %s716 = vtos %v715
          %v717 = vld [vmem:[#allocation3] sm:$0xff]
          %v718 = vld [vmem:[#allocation3 + $0x8] sm:$0xff]
          %720 = vset.pattern.permute.xlu0 0
          %721 = vperm.xlu0 %720, %v704
          %v722 = vpop.permute.xlu0 %721
          %v724 = vmul.f32 %v717, %v722
          %v725 = vmul.f32 %v718, %v722
          %v726 = vadd.f32 %v724, %v725
          %727 = vadd.xlane.f32.xlu0 %v726
          %v728 = vpop.xlane.xlu0 %727
          %v729 = vrot.slane %v728, 4
          %v730 = vadd.f32 %v728, %v729
          %v731 = vrot.slane %v730, 2
          %v732 = vadd.f32 %v730, %v731
          %v733 = vrot.slane %v732, 1
          %v734 = vadd.f32 %v732, %v733
          %s735 = vtos %v734
          %v736 = vld [vmem:[#allocation4] sm:$0xff]
          %v737 = vld [vmem:[#allocation4 + $0x8] sm:$0xff]
          %v738 = vadd.f32 %v736, %v737
          %739 = vadd.xlane.f32.xlu0 %v738
          %v740 = vpop.xlane.xlu0 %739
          %v741 = vrot.slane %v740, 4
          %v742 = vadd.f32 %v740, %v741
          %v743 = vrot.slane %v742, 2
          %v744 = vadd.f32 %v742, %v743
          %v745 = vrot.slane %v744, 1
          %v746 = vadd.f32 %v744, %v745
          %s747 = vtos %v746
          %v748 = vmul.f32 %v704, %v704
          %vm749 = vcmask 7168
          %v750 = vsel %vm749, %v748, 0.0
          %751 = vadd.xlane.f32.xlu0 %v750
          %v752 = vpop.xlane.xlu0 %751
          %v753 = vrot.slane %v752, 4
          %v754 = vadd.f32 %v752, %v753
          %v755 = vrot.slane %v754, 2
          %v756 = vadd.f32 %v754, %v755
          %v757 = vrot.slane %v756, 1
          %v758 = vadd.f32 %v756, %v757
          %s759 = vtos %v758
          %s760 = smul.f32 %s716, 0.0009765625
          %s761 = sld [smem:[#allocation11 + %s32]]
          %s762 = sld [smem:[#allocation14]]
          %s763 = sld [smem:[#allocation14 + $0x1]]
          %s764 = smul.f32 %s760, %s763
          %s765 = sadd.f32 %s762, %s764
          %s766 = smul.f32 %s761, %s765
          %s767 = smul.f32 %s766, 2.0
          %s768 = smul.f32 %s767, %s735
          %s769 = sadd.f32 %s747, %s768
          %s770 = smul.f32 %s766, %s766
          %s771 = smul.f32 %s770, 256.0
          %s772 = smul.f32 %s771, %s759
          %s773 = sadd.f32 %s769, %s772
          %s774 = sld [smem:[#allocation10 + %s32]]
          %s775 = smul.f32 %s774, %s773
          %s776 = smul.f32 %s775, 0.0009765625
          %v777 = vstv %s776
          %vm778 = vcmask 0
          %779 = vst.msk [vmem:[%s551] sm:$0x1] %vm778, %v777
        $region104: #{tpu_custom_call.1} parent=67 // pred_fallthru
          _
        %p780 = scmp.lt.s32.totalorder %s32, 1
        %s781 = scalar_select %p780, %s32, 1
        %s782 = scalar_lea.vmem %s12, %s781
        // Predicated region
        $region105: #{tpu_custom_call.1} parent=67 // pred_check
          %p783 = pneg %p324
        $region106: #{tpu_custom_call.1} parent=67 // pred_check_branch
          %785 = sbr.rel (%p783) target = $region108
        $region107: #{tpu_custom_call.1} parent=67 // pred_region
          _
        $region108: #{tpu_custom_call.1} parent=67 // pred_fallthru
          _
      $region68: #{tpu_custom_call.1} parent=5 // pred_fallthru
        _
      %p786 = scmp.le.s32.totalorder 2, %s23
      // Predicated region
      $region109: #{tpu_custom_call.1} parent=5 // pred_check
        %p787 = pneg %p786
      $region110: #{tpu_custom_call.1} parent=5 // pred_check_branch
        %789 = sbr.rel (%p787) target = $region112
      $region111: #{tpu_custom_call.1} parent=5 // pred_region
        %s790 = ssub.s32 %s23, 2
        // Predicated region
        $region113: #{tpu_custom_call.1} parent=111 // pred_check
          %p791 = pneg %p330
        $region114: #{tpu_custom_call.1} parent=111 // pred_check_branch
          %793 = sbr.rel (%p791) target = $region116
        $region115: #{tpu_custom_call.1} parent=111 // pred_region
          %p794 = scmp.lt.s32.totalorder %s34, 1
          %s795 = scalar_select %p794, %s34, 1
          %s796 = scalar_lea.vmem %s12, %s795
        $region116: #{tpu_custom_call.1} parent=111 // pred_fallthru
          _
      $region112: #{tpu_custom_call.1} parent=5 // pred_fallthru
        _
    $region6: #{tpu_custom_call.1} parent=1 // loop_footer
      %s27 = sadd.s32 1, %s23
    $region7: #{tpu_custom_call.1} parent=1 // loop_footer_branch
      %22 = sbr.rel target = $region3
    $region8: #{tpu_custom_call.1} parent=1 // loop_exit
      _
    %797 = vsyncpa [#allocation6], 1
    %s798 = scalar_lea.sflag [#allocation6], 1
    %799 = vsyncpa %s798, 1
    %800 = vsyncpa [#allocation7], 1
    %s801 = scalar_lea.sflag [#allocation7], 1
    %802 = vsyncpa %s801, 1
    %803 = vsyncpa [#allocation9], 1
    %804 = vsyncpa [#allocation12], 1
    %805 = vsyncpa [#allocation15], 1

</llo_original>
